<compile_context>
chip_gen: v5e
topology: v5e:2x2
jax: 0.10.0
libtpu: 0.0.40
codegen_flags: <defaults>
</compile_context>

<pallas_src>
import functools

import jax
import jax.numpy as jnp
from jax.experimental import pallas as pl
from jax.experimental.pallas import tpu as pltpu


LANE = 128       # TPU lane width; the tiny num_labels output is padded to this
MIN_TILE = 16    # bf16 sublane packing -> keep row tiles a multiple of 16


def _round_up(x, m):
    return pl.cdiv(x, m) * m


def _default_epilogue_dtype():
    """bf16 bias+tanh on chips with bf16 VPU/EUP (v6e/v7x); f32 elsewhere (v5e-safe)."""
    try:
        kind = jax.devices()[0].device_kind.lower()
    except Exception:
        return jnp.float32
    if ("v6" in kind) or ("v7" in kind):
        return jnp.bfloat16
    return jnp.float32


def classification_head_kernel(x_ref, w1t_ref, b1_ref, w2t_ref, b2_ref, o_ref,
                               *, epilogue_dtype):
    """One row tile of: tanh(x @ W1^T + b1) @ W2^T + b2.

    x_ref  : (tm, 2H)    input rows, bf16 (streamed)
    w1t_ref: (2H, H)     dense weight, pre-transposed, bf16 (VMEM-resident)
    b1_ref : (1, H)      dense bias, f32 (resident)
    w2t_ref: (H, NPAD)   out_proj weight, pre-transposed + zero padded to 128 lanes, bf16
    b2_ref : (1, NPAD)   out_proj bias, zero padded, f32
    o_ref  : (tm, NPAD)  lane-dense logits slab; only [:, :num_labels] is meaningful
    """
    # TODO(synk): dropout is identity at inference; training-mode stochastic dropout
    # (pltpu.prng_*) is not implemented in-kernel.
    x = x_ref[...]
    if x.dtype != w1t_ref.dtype:
        x = x.astype(w1t_ref.dtype)                              # no-op when already bf16
    h = jnp.dot(x, w1t_ref[...], preferred_element_type=jnp.float32)
    h = h + b1_ref[...]                                          # f32 bias add
    h = jnp.tanh(h.astype(epilogue_dtype))                       # bf16 EUP on v6e/v7x, f32 on v5e
    y = jnp.dot(h.astype(w2t_ref.dtype), w2t_ref[...],
                preferred_element_type=jnp.float32)
    y = y + b2_ref[...]
    o_ref[...] = y.astype(o_ref.dtype)


def prepare_head_params(w_dense, b_dense, w_out, b_out, *, param_dtype=jnp.bfloat16):
    """One-time parameter prep (model-load time, not per forward call):
       - transpose nn.Linear weights to [in, out]
       - cast matmul weights to bf16 (biases stay f32 for the f32 accumulate/epilogue)
       - zero-pad out_proj to a lane-dense (H, 128) slab
    """
    h_out, _ = w_dense.shape              # dense: Linear(2H -> H), PyTorch weight [H, 2H]
    n_labels = w_out.shape[0]             # out_proj: Linear(H -> n_labels)
    n_pad = _round_up(max(n_labels, 1), LANE)

    w1t = jnp.asarray(w_dense, jnp.float32).T.astype(param_dtype)          # [2H, H]
    b1 = jnp.asarray(b_dense, jnp.float32).reshape(1, h_out)               # [1, H]
    w2t = jnp.zeros((h_out, n_pad), param_dtype)
    w2t = w2t.at[:, :n_labels].set(jnp.asarray(w_out, jnp.float32).T.astype(param_dtype))
    b2 = jnp.zeros((1, n_pad), jnp.float32)
    b2 = b2.at[0, :n_labels].set(jnp.asarray(b_out, jnp.float32))
    return {"w1t": w1t, "b1": b1, "w2t": w2t, "b2": b2, "num_labels": n_labels}


def roberta_classification_head_forward(x, params, *, tm=1024,
                                        out_dtype=jnp.bfloat16, epilogue_dtype=None):
    """x: any shape; regrouped as [-1, 2 * x.shape[-1]] exactly like torch's
    `x.reshape(-1, x.size(-1) * 2)`. Returns [M, num_labels] logits (out_dtype)."""
    d = x.shape[-1]
    k1 = 2 * d
    x2 = x.reshape(-1, k1)
    m = x2.shape[0]

    w1t, b1, w2t, b2 = params["w1t"], params["b1"], params["w2t"], params["b2"]
    n_labels = params["num_labels"]
    h = w1t.shape[1]
    n_pad = w2t.shape[1]
    assert w1t.shape[0] == k1, "dense in-features must equal 2 * x.shape[-1]"

    # Stream the activation in bf16 (it is the dominant HBM traffic). In a full model
    # this cast should be fused into the producing matmul upstream.
    if x2.dtype != w1t.dtype:
        x2 = x2.astype(w1t.dtype)

    if epilogue_dtype is None:
        epilogue_dtype = _default_epilogue_dtype()

    # Row tiling: big tiles, ragged last block (no full-array pad). Clamp so the grid
    # has >= 2 steps when there is enough work (v7x megacore sharding).
    tm = max(MIN_TILE, (int(tm) // MIN_TILE) * MIN_TILE)
    if m >= 2 * MIN_TILE:
        tm_eff = min(tm, _round_up(pl.cdiv(m, 2), MIN_TILE))
    else:
        tm_eff = MIN_TILE
        if m < MIN_TILE:
            # Tiny last-resort pad (< 16 rows) so the single block fits the array.
            x2 = jnp.pad(x2, ((0, MIN_TILE - m), (0, 0)))
    m_rows = x2.shape[0]
    grid = (pl.cdiv(m_rows, tm_eff),)   # ragged last block: OOB writes masked by Pallas

    kernel = functools.partial(classification_head_kernel, epilogue_dtype=epilogue_dtype)

    def call(single_buffer_weights):
        if single_buffer_weights:
            # Constant-index (resident) operands: fetched once -> single buffer.
            def res(shape):
                return pl.BlockSpec(shape, lambda i: (0, 0), pipeline_mode=pl.Buffered(1))
        else:
            def res(shape):
                return pl.BlockSpec(shape, lambda i: (0, 0))
        return pl.pallas_call(
            kernel,
            out_shape=jax.ShapeDtypeStruct((m_rows, n_pad), out_dtype),
            grid_spec=pltpu.PrefetchScalarGridSpec(
                num_scalar_prefetch=0,
                grid=grid,
                in_specs=[
                    pl.BlockSpec((tm_eff, k1), lambda i: (i, 0)),  # x tile streams (bf16)
                    res((k1, h)),       # dense W^T (VMEM-resident)
                    res((1, h)),        # dense bias (resident)
                    res((h, n_pad)),    # out_proj W^T (resident, lane-padded)
                    res((1, n_pad)),    # out_proj bias (resident)
                ],
                out_specs=pl.BlockSpec((tm_eff, n_pad), lambda i: (i, 0)),
            ),
            compiler_params=pltpu.CompilerParams(
                dimension_semantics=("parallel",),   # row tiles shard across TCs (v7x)
                vmem_limit_bytes=32 * 1024 * 1024,   # v7x has 64 MiB/TC; 32 MiB covers tm=1024 @ H=1024
            ),
        )(x2, w1t, b1, w2t, b2)

    try:
        out = call(single_buffer_weights=hasattr(pl, "Buffered"))
    except Exception:
        # Fallback: default double-buffered weight specs (previously validated path).
        out = call(single_buffer_weights=False)

    return out[:m, :n_labels]


if __name__ == "__main__":
    key = jax.random.PRNGKey(0)
    k_x, k_w1, k_b1, k_w2, k_b2 = jax.random.split(key, 5)

    # Small shapes consistent with the module: encoder_embed_dim=32, num_labels=2.
    batch, seq, embed = 2, 8, 32
    x = jax.random.normal(k_x, (batch, seq, embed), jnp.float32)

    # nn.Linear-style uniform init (deterministic via PRNGKey(0) splits)
    bound1 = 1.0 / jnp.sqrt(jnp.float32(2 * embed))
    w_dense = jax.random.uniform(k_w1, (embed, 2 * embed), jnp.float32, -bound1, bound1)
    b_dense = jax.random.uniform(k_b1, (embed,), jnp.float32, -bound1, bound1)
    bound2 = 1.0 / jnp.sqrt(jnp.float32(embed))
    w_out = jax.random.uniform(k_w2, (2, embed), jnp.float32, -bound2, bound2)
    b_out = jax.random.uniform(k_b2, (2,), jnp.float32, -bound2, bound2)

    params = prepare_head_params(w_dense, b_dense, w_out, b_out)

    logits = roberta_classification_head_forward(x, params)
    logits = jax.block_until_ready(logits)

    # Pure-JAX f32 reference (eval-mode dropout = identity)
    x2 = x.reshape(-1, 2 * embed)
    ref = jnp.tanh(x2 @ w_dense.T + b_dense) @ w_out.T + b_out

    assert logits.shape == (batch * seq // 2, 2)
    logits_f32 = logits.astype(jnp.float32)
    max_err = float(jnp.max(jnp.abs(logits_f32 - ref)))
    assert jnp.allclose(logits_f32, ref, atol=5e-2, rtol=5e-2), max_err

    print("KERNEL_OK")
</pallas_src>

<mosaic_0001>
module attributes {stable_mosaic.version = 11 : i64} {
  func.func @classification_head_kernel(%arg0: i32, %arg1: memref<16x64xbf16, #tpu.memory_space<vmem>>, %arg2: memref<64x32xbf16, #tpu.memory_space<vmem>>, %arg3: memref<1x32xf32, #tpu.memory_space<vmem>>, %arg4: memref<32x128xbf16, #tpu.memory_space<vmem>>, %arg5: memref<1x128xf32, #tpu.memory_space<vmem>>, %arg6: memref<16x128xbf16, #tpu.memory_space<vmem>>) attributes {dimension_semantics = [#tpu.dimension_semantics<parallel>], iteration_bounds = array<i64: 1>, scalar_prefetch = 0 : i64, scratch_operands = 0 : i64, tpu.core_type = #tpu.core_type<tc>, window_params = [{transform_indices = @transform_0, window_bounds = array<i64: 16, 64>}, {pipeline_mode = #tpu.pipeline_mode<synchronous>, transform_indices = @transform_1, window_bounds = array<i64: 64, 32>}, {pipeline_mode = #tpu.pipeline_mode<synchronous>, transform_indices = @transform_2, window_bounds = array<i64: 1, 32>}, {pipeline_mode = #tpu.pipeline_mode<synchronous>, transform_indices = @transform_3, window_bounds = array<i64: 32, 128>}, {pipeline_mode = #tpu.pipeline_mode<synchronous>, transform_indices = @transform_4, window_bounds = array<i64: 1, 128>}, {transform_indices = @transform_5, window_bounds = array<i64: 16, 128>}]} {
    %c0 = arith.constant 0 : index
    %c0_0 = arith.constant 0 : index
    %0 = vector.load %arg1[%c0, %c0_0] : memref<16x64xbf16, #tpu.memory_space<vmem>>, vector<16x64xbf16>
    %c0_1 = arith.constant 0 : index
    %c0_2 = arith.constant 0 : index
    %1 = vector.load %arg2[%c0_1, %c0_2] : memref<64x32xbf16, #tpu.memory_space<vmem>>, vector<64x32xbf16>
    %cst = arith.constant dense<0.000000e+00> : vector<16x32xf32>
    %2 = tpu.matmul %0, %1, %cst {dimension_numbers = #tpu.dot_dimension_numbers<[1], [0], [0], [1], [0, 0, 1, 1], [], []>} : vector<16x64xbf16>, vector<64x32xbf16>, vector<16x32xf32> -> vector<16x32xf32>
    %c0_3 = arith.constant 0 : index
    %c0_4 = arith.constant 0 : index
    %3 = vector.load %arg3[%c0_3, %c0_4] : memref<1x32xf32, #tpu.memory_space<vmem>>, vector<1x32xf32>
    %4 = vector.broadcast %3 : vector<1x32xf32> to vector<16x32xf32>
    %5 = arith.addf %2, %4 : vector<16x32xf32>
    %6 = math.tanh %5 : vector<16x32xf32>
    %7 = arith.truncf %6 : vector<16x32xf32> to vector<16x32xbf16>
    %c0_5 = arith.constant 0 : index
    %c0_6 = arith.constant 0 : index
    %8 = vector.load %arg4[%c0_5, %c0_6] : memref<32x128xbf16, #tpu.memory_space<vmem>>, vector<32x128xbf16>
    %cst_7 = arith.constant dense<0.000000e+00> : vector<16x128xf32>
    %9 = tpu.matmul %7, %8, %cst_7 {dimension_numbers = #tpu.dot_dimension_numbers<[1], [0], [0], [1], [0, 0, 1, 1], [], []>} : vector<16x32xbf16>, vector<32x128xbf16>, vector<16x128xf32> -> vector<16x128xf32>
    %c0_8 = arith.constant 0 : index
    %c0_9 = arith.constant 0 : index
    %10 = vector.load %arg5[%c0_8, %c0_9] : memref<1x128xf32, #tpu.memory_space<vmem>>, vector<1x128xf32>
    %11 = vector.broadcast %10 : vector<1x128xf32> to vector<16x128xf32>
    %12 = arith.addf %9, %11 : vector<16x128xf32>
    %13 = arith.truncf %12 : vector<16x128xf32> to vector<16x128xbf16>
    %c0_10 = arith.constant 0 : index
    %c0_11 = arith.constant 0 : index
    %14 = vector.load %arg6[%c0_10, %c0_11] : memref<16x128xbf16, #tpu.memory_space<vmem>>, vector<16x128xbf16>
    tpu.vector_store %arg6[%c0_10, %c0_11], %13 {strides = array<i32>} : memref<16x128xbf16, #tpu.memory_space<vmem>>, vector<16x128xbf16>,
    return
  }
  func.func @transform_0(%arg0: i32) -> (i32, i32) {
    %c0_i32 = arith.constant 0 : i32
    %c0_i32_0 = arith.constant 0 : i32
    return %arg0, %c0_i32 : i32, i32
  }
  func.func @transform_1(%arg0: i32) -> (i32, i32) {
    %c0_i32 = arith.constant 0 : i32
    %c0_i32_0 = arith.constant 0 : i32
    %c0_i32_1 = arith.constant 0 : i32
    return %c0_i32, %c0_i32_0 : i32, i32
  }
  func.func @transform_2(%arg0: i32) -> (i32, i32) {
    %c0_i32 = arith.constant 0 : i32
    %c0_i32_0 = arith.constant 0 : i32
    %c0_i32_1 = arith.constant 0 : i32
    return %c0_i32, %c0_i32_0 : i32, i32
  }
  func.func @transform_3(%arg0: i32) -> (i32, i32) {
    %c0_i32 = arith.constant 0 : i32
    %c0_i32_0 = arith.constant 0 : i32
    %c0_i32_1 = arith.constant 0 : i32
    return %c0_i32, %c0_i32_0 : i32, i32
  }
  func.func @transform_4(%arg0: i32) -> (i32, i32) {
    %c0_i32 = arith.constant 0 : i32
    %c0_i32_0 = arith.constant 0 : i32
    %c0_i32_1 = arith.constant 0 : i32
    return %c0_i32, %c0_i32_0 : i32, i32
  }
  func.func @transform_5(%arg0: i32) -> (i32, i32) {
    %c0_i32 = arith.constant 0 : i32
    %c0_i32_0 = arith.constant 0 : i32
    return %arg0, %c0_i32 : i32, i32
  }
}

module attributes {stable_mosaic.version = 11 : i64} {
  func.func @classification_head_kernel(%arg0: i32, %arg1: memref<16x64xbf16, #tpu.memory_space<vmem>>, %arg2: memref<64x32xbf16, #tpu.memory_space<vmem>>, %arg3: memref<1x32xf32, #tpu.memory_space<vmem>>, %arg4: memref<32x128xbf16, #tpu.memory_space<vmem>>, %arg5: memref<1x128xf32, #tpu.memory_space<vmem>>, %arg6: memref<16x128xbf16, #tpu.memory_space<vmem>>) attributes {dimension_semantics = [#tpu.dimension_semantics<parallel>], iteration_bounds = array<i64: 1>, scalar_prefetch = 0 : i64, scratch_operands = 0 : i64, tpu.core_type = #tpu.core_type<tc>, window_params = [{transform_indices = @transform_0, window_bounds = array<i64: 16, 64>}, {pipeline_mode = #tpu.pipeline_mode<synchronous>, transform_indices = @transform_1, window_bounds = array<i64: 64, 32>}, {pipeline_mode = #tpu.pipeline_mode<synchronous>, transform_indices = @transform_2, window_bounds = array<i64: 1, 32>}, {pipeline_mode = #tpu.pipeline_mode<synchronous>, transform_indices = @transform_3, window_bounds = array<i64: 32, 128>}, {pipeline_mode = #tpu.pipeline_mode<synchronous>, transform_indices = @transform_4, window_bounds = array<i64: 1, 128>}, {transform_indices = @transform_5, window_bounds = array<i64: 16, 128>}]} {
    %c0 = arith.constant 0 : index
    %c0_0 = arith.constant 0 : index
    %0 = vector.load %arg1[%c0, %c0_0] : memref<16x64xbf16, #tpu.memory_space<vmem>>, vector<16x64xbf16>
    %c0_1 = arith.constant 0 : index
    %c0_2 = arith.constant 0 : index
    %1 = vector.load %arg2[%c0_1, %c0_2] : memref<64x32xbf16, #tpu.memory_space<vmem>>, vector<64x32xbf16>
    %cst = arith.constant dense<0.000000e+00> : vector<16x32xf32>
    %2 = tpu.matmul %0, %1, %cst {dimension_numbers = #tpu.dot_dimension_numbers<[1], [0], [0], [1], [0, 0, 1, 1], [], []>} : vector<16x64xbf16>, vector<64x32xbf16>, vector<16x32xf32> -> vector<16x32xf32>
    %c0_3 = arith.constant 0 : index
    %c0_4 = arith.constant 0 : index
    %3 = vector.load %arg3[%c0_3, %c0_4] : memref<1x32xf32, #tpu.memory_space<vmem>>, vector<1x32xf32>
    %4 = vector.broadcast %3 : vector<1x32xf32> to vector<16x32xf32>
    %5 = arith.addf %2, %4 : vector<16x32xf32>
    %6 = math.tanh %5 : vector<16x32xf32>
    %7 = arith.truncf %6 : vector<16x32xf32> to vector<16x32xbf16>
    %c0_5 = arith.constant 0 : index
    %c0_6 = arith.constant 0 : index
    %8 = vector.load %arg4[%c0_5, %c0_6] : memref<32x128xbf16, #tpu.memory_space<vmem>>, vector<32x128xbf16>
    %cst_7 = arith.constant dense<0.000000e+00> : vector<16x128xf32>
    %9 = tpu.matmul %7, %8, %cst_7 {dimension_numbers = #tpu.dot_dimension_numbers<[1], [0], [0], [1], [0, 0, 1, 1], [], []>} : vector<16x32xbf16>, vector<32x128xbf16>, vector<16x128xf32> -> vector<16x128xf32>
    %c0_8 = arith.constant 0 : index
    %c0_9 = arith.constant 0 : index
    %10 = vector.load %arg5[%c0_8, %c0_9] : memref<1x128xf32, #tpu.memory_space<vmem>>, vector<1x128xf32>
    %11 = vector.broadcast %10 : vector<1x128xf32> to vector<16x128xf32>
    %12 = arith.addf %9, %11 : vector<16x128xf32>
    %13 = arith.truncf %12 : vector<16x128xf32> to vector<16x128xbf16>
    %c0_10 = arith.constant 0 : index
    %c0_11 = arith.constant 0 : index
    %14 = vector.load %arg6[%c0_10, %c0_11] : memref<16x128xbf16, #tpu.memory_space<vmem>>, vector<16x128xbf16>
    tpu.vector_store %arg6[%c0_10, %c0_11], %13 {strides = array<i32>} : memref<16x128xbf16, #tpu.memory_space<vmem>>, vector<16x128xbf16>,
    return
  }
  func.func @transform_0(%arg0: i32) -> (i32, i32) {
    %c0_i32 = arith.constant 0 : i32
    %c0_i32_0 = arith.constant 0 : i32
    return %arg0, %c0_i32 : i32, i32
  }
  func.func @transform_1(%arg0: i32) -> (i32, i32) {
    %c0_i32 = arith.constant 0 : i32
    %c0_i32_0 = arith.constant 0 : i32
    %c0_i32_1 = arith.constant 0 : i32
    return %c0_i32, %c0_i32_0 : i32, i32
  }
  func.func @transform_2(%arg0: i32) -> (i32, i32) {
    %c0_i32 = arith.constant 0 : i32
    %c0_i32_0 = arith.constant 0 : i32
    %c0_i32_1 = arith.constant 0 : i32
    return %c0_i32, %c0_i32_0 : i32, i32
  }
  func.func @transform_3(%arg0: i32) -> (i32, i32) {
    %c0_i32 = arith.constant 0 : i32
    %c0_i32_0 = arith.constant 0 : i32
    %c0_i32_1 = arith.constant 0 : i32
    return %c0_i32, %c0_i32_0 : i32, i32
  }
  func.func @transform_4(%arg0: i32) -> (i32, i32) {
    %c0_i32 = arith.constant 0 : i32
    %c0_i32_0 = arith.constant 0 : i32
    %c0_i32_1 = arith.constant 0 : i32
    return %c0_i32, %c0_i32_0 : i32, i32
  }
  func.func @transform_5(%arg0: i32) -> (i32, i32) {
    %c0_i32 = arith.constant 0 : i32
    %c0_i32_0 = arith.constant 0 : i32
    return %arg0, %c0_i32 : i32, i32
  }
}

</mosaic_0001>

<llo_original>
// kernel: tpu_custom_call.1
$region0: #{tpu_custom_call.1}
  #allocation0 [shape = 'u32[]', space=smem, size = 0x4, offset = 0x4, fixed_abs, tag = 'smem constant byte address 0x4 - core index']
  #allocation1 [shape = 'u32[72,128]{1,0:T(1,128)}', space=vmem, size = 0x9000, scoped, tag = 'internal scratch']
  %s0 = inlined_call_operand.vmem [shape: bf16[16,64], index: 0, kind: input, shape index: {}]
  %s1 = inlined_call_operand.vmem [shape: bf16[64,32], index: 1, kind: input, shape index: {}]
  %s2 = inlined_call_operand.vmem [shape: f32[1,32], index: 2, kind: input, shape index: {}]
  %s3 = inlined_call_operand.vmem [shape: bf16[32,128], index: 3, kind: input, shape index: {}]
  %s4 = inlined_call_operand.vmem [shape: f32[1,128], index: 4, kind: input, shape index: {}]
  %s5 = inlined_call_operand.hbm [shape: bf16[16,128], index: 5, kind: output, shape index: {}]
  %s6 = sld [smem:[#allocation0]]
  $region30: #{tpu_custom_call.1} parent=0
    _
  %s8 = ssub.s32 1, %s6
  %s9 = scalar_select 0, %s8, %s6
  $region1: #{tpu_custom_call.1} parent=0
    #allocation2 [shape = 'u8[4096]{0}', space=vmem, size = 0x1000, scoped, tag = 'output window, operand 0, single buffered']
    #allocation3 [shape = 's32[1]{0}', space=sflag, size = 0x4, scoped, tag = 'scoped memory for tpu_custom_call.1']
    %10 = vsyncpa [#allocation3], 0
    // Predicated region
    $region2: #{tpu_custom_call.1} parent=1 // pred_check
      _
    $region3: #{tpu_custom_call.1} parent=1 // pred_check_branch
      %12 = sbr.rel (0) target = $region5
    $region4: #{tpu_custom_call.1} parent=1 // pred_region
      _
    $region5: #{tpu_custom_call.1} parent=1 // pred_fallthru
      _
    // Predicated region
    $region6: #{tpu_custom_call.1} parent=1 // pred_check
      _
    $region7: #{tpu_custom_call.1} parent=1 // pred_check_branch
      %14 = sbr.rel (0) target = $region9
    $region8: #{tpu_custom_call.1} parent=1 // pred_region
      _
    $region9: #{tpu_custom_call.1} parent=1 // pred_fallthru
      _
    // Predicated region
    $region10: #{tpu_custom_call.1} parent=1 // pred_check
      _
    $region11: #{tpu_custom_call.1} parent=1 // pred_check_branch
      %16 = sbr.rel (0) target = $region13
    $region12: #{tpu_custom_call.1} parent=1 // pred_region
      _
    $region13: #{tpu_custom_call.1} parent=1 // pred_fallthru
      _
    // Predicated region
    $region14: #{tpu_custom_call.1} parent=1 // pred_check
      _
    $region15: #{tpu_custom_call.1} parent=1 // pred_check_branch
      %18 = sbr.rel (0) target = $region17
    $region16: #{tpu_custom_call.1} parent=1 // pred_region
      _
    $region17: #{tpu_custom_call.1} parent=1 // pred_fallthru
      _
    // Predicated region
    $region18: #{tpu_custom_call.1} parent=1 // pred_check
      _
    $region19: #{tpu_custom_call.1} parent=1 // pred_check_branch
      %20 = sbr.rel (0) target = $region21
    $region20: #{tpu_custom_call.1} parent=1 // pred_region
      _
    $region21: #{tpu_custom_call.1} parent=1 // pred_fallthru
      _
    %v22 = vld [vmem:[%s0] sm:$0xf]
    %v23 = vld [vmem:[%s0 + $0x4] sm:$0xf]
    %v24 = vld [vmem:[%s1] sm:$0xf]
    %v25 = vld [vmem:[%s1 + $0x4] sm:$0xf]
    %v26 = vld [vmem:[%s1 + $0x8] sm:$0xf]
    %v27 = vld [vmem:[%s1 + $0xc] sm:$0xf]
    %v28 = vld [vmem:[%s1 + $0x10] sm:$0xf]
    %v29 = vld [vmem:[%s1 + $0x14] sm:$0xf]
    %v30 = vld [vmem:[%s1 + $0x18] sm:$0xf]
    %v31 = vld [vmem:[%s1 + $0x1c] sm:$0xf]
    %v32 = vld [vmem:[%s2] sm:$0x1]
    %v34 = vperm.slane %v32, 0
    %v38 = vunpack.c.l.b16 %v22
    %v39 = vunpack.c.l.b16 %v23
    %v40 = vpack.c.b16 %v39, %v38
    %v49 = vunpack.c.l.b16 %v24
    %v50 = vunpack.c.l.b16 %v25
    %v51 = vunpack.c.l.b16 %v26
    %v52 = vunpack.c.l.b16 %v27
    %v53 = vunpack.c.l.b16 %v28
    %v54 = vunpack.c.l.b16 %v29
    %v55 = vunpack.c.l.b16 %v30
    %v56 = vunpack.c.l.b16 %v31
    %v57 = vpack.c.b16 %v50, %v49
    %v58 = vpack.c.b16 %v52, %v51
    %v59 = vpack.c.b16 %v54, %v53
    %v60 = vpack.c.b16 %v56, %v55
    %vm65 = vcmask 523264
    %v67 = vsel %vm65, %v40, 0
    %69 = vmatpush.bf16.msra.mxu0 0
    %70 = vmatpush.bf16.msra.mxu0 0
    %71 = vmatpush.bf16.msra.mxu0 0
    %72 = vmatpush.bf16.msra.mxu0 0
    %73 = vmatpush.bf16.msra.mxu0 %v60
    %74 = vmatpush.bf16.msra.mxu0 %v59
    %75 = vmatpush.bf16.msra.mxu0 %v58
    %76 = vmatpush.bf16.msra.mxu0 %v57
    %77 = vmatmul.bf16.gmra.mxu0 %v67
    %v78 = vpop.f32.mrf.mxu0
    %v79 = vadd.f32 %v34, %v78
    %v80 = vpop.f32.mrf.mxu0
    %v81 = vadd.f32 %v34, %v80
    %82 = vdwg.mxu0
    %v83 = vtanh.pop %v79
    %v84 = vtanh.pop %v81
    %v85 = vpack.c.bf16 %v84, %v83
    %v86 = vld [vmem:[%s3] sm:$0xf]
    %v87 = vld [vmem:[%s3 + $0x4] sm:$0xf]
    %v88 = vld [vmem:[%s3 + $0x8] sm:$0xf]
    %v89 = vld [vmem:[%s3 + $0xc] sm:$0xf]
    %v90 = vld [vmem:[%s4] sm:$0x1]
    %v92 = vperm.slane %v90, 0
    %v98 = vunpack.c.l.b16 %v86
    %v99 = vunpack.c.l.b16 %v87
    %v100 = vunpack.c.l.b16 %v88
    %v101 = vunpack.c.l.b16 %v89
    %v102 = vpack.c.b16 %v99, %v98
    %v103 = vpack.c.b16 %v101, %v100
    %vm106 = vcmask 261120
    %v108 = vsel %vm106, %v85, 0
    %110 = vmatpush.bf16.msra.mxu0 0
    %111 = vmatpush.bf16.msra.mxu0 0
    %112 = vmatpush.bf16.msra.mxu0 0
    %113 = vmatpush.bf16.msra.mxu0 0
    %114 = vmatpush.bf16.msra.mxu0 0
    %115 = vmatpush.bf16.msra.mxu0 0
    %116 = vmatpush.bf16.msra.mxu0 %v103
    %117 = vmatpush.bf16.msra.mxu0 %v102
    %118 = vmatmul.bf16.gmra.mxu0 %v108
    %v119 = vpop.f32.mrf.mxu0
    %v120 = vadd.f32 %v92, %v119
    %v121 = vpop.f32.mrf.mxu0
    %v122 = vadd.f32 %v92, %v121
    %123 = vdwg.mxu0
    %v124 = vpack.c.bf16 %v120, %v120
    %v125 = vpack.c.bf16 %v122, %v122
    %126 = vst [vmem:[#allocation2] sm:$0xf] %v124
    %127 = vst [vmem:[#allocation2 + $0x4] sm:$0xf] %v125
    // Predicated region
    $region22: #{tpu_custom_call.1} parent=1 // pred_check
      _
    $region23: #{tpu_custom_call.1} parent=1 // pred_check_branch
      %129 = sbr.rel (0) target = $region25
    $region24: #{tpu_custom_call.1} parent=1 // pred_region
      %131 = vsyncadd [#allocation3], 0
      %s132 = sshll.u32 [#allocation2], 4
      %s133 = int_to_ptr.vmem [resolvable:$true] %s132
      %s134 = sshll.u32 %s5, 4
      %s135 = int_to_ptr.hbm [resolvable:$true] %s134
      %140 = dma.vmem_to_hbm [thread:$0]  %s133, 128, %s135, [#allocation3], 64, 64, 4
    $region25: #{tpu_custom_call.1} parent=1 // pred_fallthru
      _
    // Predicated region
    $region26: #{tpu_custom_call.1} parent=1 // pred_check
      _
    $region27: #{tpu_custom_call.1} parent=1 // pred_check_branch
      %142 = sbr.rel (0) target = $region29
    $region28: #{tpu_custom_call.1} parent=1 // pred_region
      %144 = dma.done [#allocation3], 128
    $region29: #{tpu_custom_call.1} parent=1 // pred_fallthru
      _
    %145 = vsyncpa [#allocation3], 1

// kernel: tpu_custom_call.1
$region0: #{tpu_custom_call.1}
  #allocation0 [shape = 'u32[]', space=smem, size = 0x4, offset = 0x4, fixed_abs, tag = 'smem constant byte address 0x4 - core index']
  #allocation1 [shape = 'u32[72,128]{1,0:T(1,128)}', space=vmem, size = 0x9000, scoped, tag = 'internal scratch']
  %s0 = inlined_call_operand.vmem [shape: bf16[16,64], index: 0, kind: input, shape index: {}]
  %s1 = inlined_call_operand.vmem [shape: bf16[64,32], index: 1, kind: input, shape index: {}]
  %s2 = inlined_call_operand.vmem [shape: f32[1,32], index: 2, kind: input, shape index: {}]
  %s3 = inlined_call_operand.vmem [shape: bf16[32,128], index: 3, kind: input, shape index: {}]
  %s4 = inlined_call_operand.vmem [shape: f32[1,128], index: 4, kind: input, shape index: {}]
  %s5 = inlined_call_operand.hbm [shape: bf16[16,128], index: 5, kind: output, shape index: {}]
  %s6 = sld [smem:[#allocation0]]
  $region30: #{tpu_custom_call.1} parent=0
    _
  %s8 = ssub.s32 1, %s6
  %s9 = scalar_select 0, %s8, %s6
  $region1: #{tpu_custom_call.1} parent=0
    #allocation2 [shape = 'u8[4096]{0}', space=vmem, size = 0x1000, scoped, tag = 'output window, operand 0, single buffered']
    #allocation3 [shape = 's32[1]{0}', space=sflag, size = 0x4, scoped, tag = 'scoped memory for tpu_custom_call.1']
    %10 = vsyncpa [#allocation3], 0
    // Predicated region
    $region2: #{tpu_custom_call.1} parent=1 // pred_check
      _
    $region3: #{tpu_custom_call.1} parent=1 // pred_check_branch
      %12 = sbr.rel (0) target = $region5
    $region4: #{tpu_custom_call.1} parent=1 // pred_region
      _
    $region5: #{tpu_custom_call.1} parent=1 // pred_fallthru
      _
    // Predicated region
    $region6: #{tpu_custom_call.1} parent=1 // pred_check
      _
    $region7: #{tpu_custom_call.1} parent=1 // pred_check_branch
      %14 = sbr.rel (0) target = $region9
    $region8: #{tpu_custom_call.1} parent=1 // pred_region
      _
    $region9: #{tpu_custom_call.1} parent=1 // pred_fallthru
      _
    // Predicated region
    $region10: #{tpu_custom_call.1} parent=1 // pred_check
      _
    $region11: #{tpu_custom_call.1} parent=1 // pred_check_branch
      %16 = sbr.rel (0) target = $region13
    $region12: #{tpu_custom_call.1} parent=1 // pred_region
      _
    $region13: #{tpu_custom_call.1} parent=1 // pred_fallthru
      _
    // Predicated region
    $region14: #{tpu_custom_call.1} parent=1 // pred_check
      _
    $region15: #{tpu_custom_call.1} parent=1 // pred_check_branch
      %18 = sbr.rel (0) target = $region17
    $region16: #{tpu_custom_call.1} parent=1 // pred_region
      _
    $region17: #{tpu_custom_call.1} parent=1 // pred_fallthru
      _
    // Predicated region
    $region18: #{tpu_custom_call.1} parent=1 // pred_check
      _
    $region19: #{tpu_custom_call.1} parent=1 // pred_check_branch
      %20 = sbr.rel (0) target = $region21
    $region20: #{tpu_custom_call.1} parent=1 // pred_region
      _
    $region21: #{tpu_custom_call.1} parent=1 // pred_fallthru
      _
    %v22 = vld [vmem:[%s0] sm:$0xf]
    %v23 = vld [vmem:[%s0 + $0x4] sm:$0xf]
    %v24 = vld [vmem:[%s1] sm:$0xf]
    %v25 = vld [vmem:[%s1 + $0x4] sm:$0xf]
    %v26 = vld [vmem:[%s1 + $0x8] sm:$0xf]
    %v27 = vld [vmem:[%s1 + $0xc] sm:$0xf]
    %v28 = vld [vmem:[%s1 + $0x10] sm:$0xf]
    %v29 = vld [vmem:[%s1 + $0x14] sm:$0xf]
    %v30 = vld [vmem:[%s1 + $0x18] sm:$0xf]
    %v31 = vld [vmem:[%s1 + $0x1c] sm:$0xf]
    %v32 = vld [vmem:[%s2] sm:$0x1]
    %v34 = vperm.slane %v32, 0
    %v38 = vunpack.c.l.b16 %v22
    %v39 = vunpack.c.l.b16 %v23
    %v40 = vpack.c.b16 %v39, %v38
    %v49 = vunpack.c.l.b16 %v24
    %v50 = vunpack.c.l.b16 %v25
    %v51 = vunpack.c.l.b16 %v26
    %v52 = vunpack.c.l.b16 %v27
    %v53 = vunpack.c.l.b16 %v28
    %v54 = vunpack.c.l.b16 %v29
    %v55 = vunpack.c.l.b16 %v30
    %v56 = vunpack.c.l.b16 %v31
    %v57 = vpack.c.b16 %v50, %v49
    %v58 = vpack.c.b16 %v52, %v51
    %v59 = vpack.c.b16 %v54, %v53
    %v60 = vpack.c.b16 %v56, %v55
    %vm65 = vcmask 523264
    %v67 = vsel %vm65, %v40, 0
    %69 = vmatpush.bf16.msra.mxu0 0
    %70 = vmatpush.bf16.msra.mxu0 0
    %71 = vmatpush.bf16.msra.mxu0 0
    %72 = vmatpush.bf16.msra.mxu0 0
    %73 = vmatpush.bf16.msra.mxu0 %v60
    %74 = vmatpush.bf16.msra.mxu0 %v59
    %75 = vmatpush.bf16.msra.mxu0 %v58
    %76 = vmatpush.bf16.msra.mxu0 %v57
    %77 = vmatmul.bf16.gmra.mxu0 %v67
    %v78 = vpop.f32.mrf.mxu0
    %v79 = vadd.f32 %v34, %v78
    %v80 = vpop.f32.mrf.mxu0
    %v81 = vadd.f32 %v34, %v80
    %82 = vdwg.mxu0
    %v83 = vtanh.pop %v79
    %v84 = vtanh.pop %v81
    %v85 = vpack.c.bf16 %v84, %v83
    %v86 = vld [vmem:[%s3] sm:$0xf]
    %v87 = vld [vmem:[%s3 + $0x4] sm:$0xf]
    %v88 = vld [vmem:[%s3 + $0x8] sm:$0xf]
    %v89 = vld [vmem:[%s3 + $0xc] sm:$0xf]
    %v90 = vld [vmem:[%s4] sm:$0x1]
    %v92 = vperm.slane %v90, 0
    %v98 = vunpack.c.l.b16 %v86
    %v99 = vunpack.c.l.b16 %v87
    %v100 = vunpack.c.l.b16 %v88
    %v101 = vunpack.c.l.b16 %v89
    %v102 = vpack.c.b16 %v99, %v98
    %v103 = vpack.c.b16 %v101, %v100
    %vm106 = vcmask 261120
    %v108 = vsel %vm106, %v85, 0
    %110 = vmatpush.bf16.msra.mxu0 0
    %111 = vmatpush.bf16.msra.mxu0 0
    %112 = vmatpush.bf16.msra.mxu0 0
    %113 = vmatpush.bf16.msra.mxu0 0
    %114 = vmatpush.bf16.msra.mxu0 0
    %115 = vmatpush.bf16.msra.mxu0 0
    %116 = vmatpush.bf16.msra.mxu0 %v103
    %117 = vmatpush.bf16.msra.mxu0 %v102
    %118 = vmatmul.bf16.gmra.mxu0 %v108
    %v119 = vpop.f32.mrf.mxu0
    %v120 = vadd.f32 %v92, %v119
    %v121 = vpop.f32.mrf.mxu0
    %v122 = vadd.f32 %v92, %v121
    %123 = vdwg.mxu0
    %v124 = vpack.c.bf16 %v120, %v120
    %v125 = vpack.c.bf16 %v122, %v122
    %126 = vst [vmem:[#allocation2] sm:$0xf] %v124
    %127 = vst [vmem:[#allocation2 + $0x4] sm:$0xf] %v125
    // Predicated region
    $region22: #{tpu_custom_call.1} parent=1 // pred_check
      _
    $region23: #{tpu_custom_call.1} parent=1 // pred_check_branch
      %129 = sbr.rel (0) target = $region25
    $region24: #{tpu_custom_call.1} parent=1 // pred_region
      %131 = vsyncadd [#allocation3], 0
      %s132 = sshll.u32 [#allocation2], 4
      %s133 = int_to_ptr.vmem [resolvable:$true] %s132
      %s134 = sshll.u32 %s5, 4
      %s135 = int_to_ptr.hbm [resolvable:$true] %s134
      %140 = dma.vmem_to_hbm [thread:$0]  %s133, 128, %s135, [#allocation3], 64, 64, 4
    $region25: #{tpu_custom_call.1} parent=1 // pred_fallthru
      _
    // Predicated region
    $region26: #{tpu_custom_call.1} parent=1 // pred_check
      _
    $region27: #{tpu_custom_call.1} parent=1 // pred_check_branch
      %142 = sbr.rel (0) target = $region29
    $region28: #{tpu_custom_call.1} parent=1 // pred_region
      %144 = dma.done [#allocation3], 128
    $region29: #{tpu_custom_call.1} parent=1 // pred_fallthru
      _
    %145 = vsyncpa [#allocation3], 1

</llo_original>
